<compile_context>
chip_gen: v7x
topology: tpu7x:2x2x1
jax: 0.10.0
libtpu: 0.0.40
codegen_flags: <defaults>
</compile_context>

<pallas_src>
import functools

import jax
import jax.numpy as jnp
from jax.experimental import pallas as pl
from jax.experimental.pallas import tpu as pltpu

LANES = 128


def _mape_partial_kernel(out_pred_ref, target_ref, partial_ref, *,
                         n_elems, tile_rows, need_mask):
    """Write an (8, 128) partial sum of |(target - output)/target| for this row tile."""
    o = out_pred_ref[...].astype(jnp.float32)
    t = target_ref[...].astype(jnp.float32)
    err = jnp.abs((t - o) / t)                      # (tile_rows, 128)

    if need_mask:
        # Zero out elements past the true element count (ragged final tile and/or
        # lane padding). Overflow-safe two-part compare (no row*128 multiply).
        row0 = pl.program_id(0) * tile_rows
        grow = row0 + jax.lax.broadcasted_iota(jnp.int32, err.shape, 0)
        lane = jax.lax.broadcasted_iota(jnp.int32, err.shape, 1)
        full_rows = n_elems // LANES
        rem = n_elems % LANES
        valid = (grow < full_rows) | ((grow == full_rows) & (lane < rem))
        err = jnp.where(valid, err, jnp.float32(0.0))

    # Reduce only along the sublane-group axis: pure VPU adds into a vreg-shaped slab.
    partial_ref[...] = jnp.sum(err.reshape(tile_rows // 8, 8, LANES), axis=0)


def mape_loss(output, target, *, max_tile_rows=1024):
    """Pallas implementation of torch.mean(torch.abs((target - output) / target))."""
    assert output.shape == target.shape
    n_elems = int(output.size)

    o_flat = output.reshape(-1)
    t_flat = target.reshape(-1)

    rows = pl.cdiv(n_elems, LANES)
    lane_pad = rows * LANES - n_elems
    if lane_pad:
        # Only when numel is not a multiple of 128 (not the case for typical shapes);
        # the pad values are discarded by the in-kernel mask.
        o_flat = jnp.pad(o_flat, (0, lane_pad), constant_values=1)
        t_flat = jnp.pad(t_flat, (0, lane_pad), constant_values=1)

    o2d = o_flat.reshape(rows, LANES)
    t2d = t_flat.reshape(rows, LANES)

    # Big blocks: multiple of 8 rows, capped; 2 inputs x 2 buffers x (1024,128) f32 = 2 MiB.
    tile_rows = min(max_tile_rows, ((rows + 7) // 8) * 8)
    num_tiles = pl.cdiv(rows, tile_rows)
    need_mask = (num_tiles * tile_rows * LANES) != n_elems

    kernel = functools.partial(
        _mape_partial_kernel,
        n_elems=n_elems, tile_rows=tile_rows, need_mask=need_mask,
    )

    in_bytes = (o2d.size * o2d.dtype.itemsize) + (t2d.size * t2d.dtype.itemsize)
    out_bytes = num_tiles * 8 * LANES * 4
    cost = pl.CostEstimate(
        flops=3 * n_elems,            # sub + div + abs/adds (order of magnitude)
        transcendentals=0,
        bytes_accessed=in_bytes + out_bytes,
    )

    partials = pl.pallas_call(
        kernel,
        out_shape=jax.ShapeDtypeStruct((num_tiles * 8, LANES), jnp.float32),
        grid_spec=pltpu.PrefetchScalarGridSpec(
            num_scalar_prefetch=0,
            grid=(num_tiles,),
            in_specs=[
                pl.BlockSpec((tile_rows, LANES), lambda i: (i, 0)),
                pl.BlockSpec((tile_rows, LANES), lambda i: (i, 0)),
            ],
            out_specs=pl.BlockSpec((8, LANES), lambda i: (i, 0)),
        ),
        compiler_params=pltpu.CompilerParams(
            # No cross-iteration state -> tiles can be sharded across TensorCores (v7x).
            dimension_semantics=("parallel",),
        ),
        cost_estimate=cost,
    )(o2d, t2d)

    # Tiny final reduction + mean over the TRUE element count (wrapper-side, negligible).
    loss = jnp.sum(partials) / jnp.float32(n_elems)
    return loss.astype(jnp.promote_types(output.dtype, target.dtype))


if __name__ == "__main__":
    key = jax.random.PRNGKey(0)
    k1, k2 = jax.random.split(key)
    shape = (2, 4, 16, 16)  # batch=2, channels=4, spatial=16x16
    output = jax.random.normal(k1, shape, dtype=jnp.float32)
    # Keep targets away from zero (as MAPE requires) while staying deterministic.
    target = jax.random.uniform(k2, shape, dtype=jnp.float32, minval=0.5, maxval=2.0)

    loss = mape_loss(output, target)
    jax.block_until_ready(loss)

    # Pure-JAX reference check.
    ref = jnp.mean(jnp.abs((target - output) / target))
    assert jnp.allclose(loss, ref, rtol=1e-5, atol=1e-5), (loss, ref)

    print("KERNEL_OK")
</pallas_src>

<mosaic_0001>
module attributes {stable_mosaic.version = 11 : i64} {
  func.func @_mape_partial_kernel(%arg0: i32, %arg1: memref<16x128xf32, #tpu.memory_space<vmem>>, %arg2: memref<16x128xf32, #tpu.memory_space<vmem>>, %arg3: memref<8x128xf32, #tpu.memory_space<vmem>>) attributes {dimension_semantics = [#tpu.dimension_semantics<parallel>], iteration_bounds = array<i64: 1>, scalar_prefetch = 0 : i64, scratch_operands = 0 : i64, tpu.core_type = #tpu.core_type<tc>, window_params = [{transform_indices = @transform_0, window_bounds = array<i64: 16, 128>}, {transform_indices = @transform_1, window_bounds = array<i64: 16, 128>}, {transform_indices = @transform_2, window_bounds = array<i64: 8, 128>}]} {
    %c0 = arith.constant 0 : index
    %c0_0 = arith.constant 0 : index
    %0 = vector.load %arg1[%c0, %c0_0] : memref<16x128xf32, #tpu.memory_space<vmem>>, vector<16x128xf32>
    %c0_1 = arith.constant 0 : index
    %c0_2 = arith.constant 0 : index
    %1 = vector.load %arg2[%c0_1, %c0_2] : memref<16x128xf32, #tpu.memory_space<vmem>>, vector<16x128xf32>
    %2 = arith.subf %1, %0 : vector<16x128xf32>
    %3 = arith.divf %2, %1 : vector<16x128xf32>
    %4 = math.absf %3 : vector<16x128xf32>
    %5 = vector.shape_cast %4 : vector<16x128xf32> to vector<2x8x128xf32>
    %cst = arith.constant dense<0.000000e+00> : vector<8x128xf32>
    %6 = vector.multi_reduction <add>, %5, %cst [0] : vector<2x8x128xf32> to vector<8x128xf32>
    %c0_3 = arith.constant 0 : index
    %c0_4 = arith.constant 0 : index
    %7 = vector.load %arg3[%c0_3, %c0_4] : memref<8x128xf32, #tpu.memory_space<vmem>>, vector<8x128xf32>
    tpu.vector_store %arg3[%c0_3, %c0_4], %6 {strides = array<i32>} : memref<8x128xf32, #tpu.memory_space<vmem>>, vector<8x128xf32>,
    return
  }
  func.func @transform_0(%arg0: i32) -> (i32, i32) {
    %c0_i32 = arith.constant 0 : i32
    %c0_i32_0 = arith.constant 0 : i32
    return %arg0, %c0_i32 : i32, i32
  }
  func.func @transform_1(%arg0: i32) -> (i32, i32) {
    %c0_i32 = arith.constant 0 : i32
    %c0_i32_0 = arith.constant 0 : i32
    return %arg0, %c0_i32 : i32, i32
  }
  func.func @transform_2(%arg0: i32) -> (i32, i32) {
    %c0_i32 = arith.constant 0 : i32
    %c0_i32_0 = arith.constant 0 : i32
    return %arg0, %c0_i32 : i32, i32
  }
}

</mosaic_0001>

<llo_original>
// kernel: tpu_custom_call.1
$region0: #{tpu_custom_call.1}
  #allocation0 [shape = 'u32[]', space=smem, size = 0x4, offset = 0x4, fixed_abs, tag = 'smem constant byte address 0x4 - core index']
  #allocation1 [shape = 'u32[144,128]{1,0:T(1,128)}', space=vmem, size = 0x12000, scoped, tag = 'internal scratch']
  %s0 = inlined_call_operand.hbm [shape: f32[16,128], index: 0, kind: input, shape index: {}]
  %s1 = inlined_call_operand.hbm [shape: f32[16,128], index: 1, kind: input, shape index: {}]
  %s2 = inlined_call_operand.hbm [shape: f32[8,128], index: 2, kind: output, shape index: {}]
  %s3 = sld [smem:[#allocation0]]
  $region26: #{tpu_custom_call.1} parent=0
    _
  %s5 = ssub.s32 1, %s3
  %s6 = scalar_select 0, %s5, %s3
  $region1: #{tpu_custom_call.1} parent=0
    #allocation2 [shape = 'u8[8192]{0}', space=vmem, size = 0x2000, scoped, tag = 'input window, operand 0, single buffered']
    #allocation3 [shape = 's32[1]{0}', space=sflag, size = 0x4, scoped, tag = 'scoped memory for tpu_custom_call.1']
    #allocation4 [shape = 's32[1]{0}', space=sflag, size = 0x4, scoped, tag = 'scoped memory for tpu_custom_call.1']
    #allocation5 [shape = 'u8[8192]{0}', space=vmem, size = 0x2000, scoped, tag = 'input window, operand 1, single buffered']
    #allocation6 [shape = 's32[1]{0}', space=sflag, size = 0x4, scoped, tag = 'scoped memory for tpu_custom_call.1']
    #allocation7 [shape = 'u8[4096]{0}', space=vmem, size = 0x1000, scoped, tag = 'output window, operand 0, single buffered']
    %7 = vsyncpa [#allocation3], 0
    %8 = vsyncpa [#allocation6], 0
    %9 = vsyncpa [#allocation4], 0
    // Predicated region
    $region2: #{tpu_custom_call.1} parent=1 // pred_check
      _
    $region3: #{tpu_custom_call.1} parent=1 // pred_check_branch
      %11 = sbr.rel (0) target = $region5
    $region4: #{tpu_custom_call.1} parent=1 // pred_region
      %s13 = ssub.s32 256, 256
      %14 = vsyncadd [#allocation3], %s13
      %s15 = sshll.u32 [#allocation2], 4
      %s16 = int_to_ptr.vmem [resolvable:$true] %s15
      %21 = dma.hbm_to_vmem [thread:$0]  %s0, 256, %s16, [#allocation3], 128, 128, 8
    $region5: #{tpu_custom_call.1} parent=1 // pred_fallthru
      _
    // Predicated region
    $region6: #{tpu_custom_call.1} parent=1 // pred_check
      _
    $region7: #{tpu_custom_call.1} parent=1 // pred_check_branch
      %23 = sbr.rel (0) target = $region9
    $region8: #{tpu_custom_call.1} parent=1 // pred_region
      %s25 = ssub.s32 256, 256
      %26 = vsyncadd [#allocation6], %s25
      %s27 = sshll.u32 [#allocation5], 4
      %s28 = int_to_ptr.vmem [resolvable:$true] %s27
      %33 = dma.hbm_to_vmem [thread:$0]  %s1, 256, %s28, [#allocation6], 128, 128, 8
    $region9: #{tpu_custom_call.1} parent=1 // pred_fallthru
      _
    // Predicated region
    $region10: #{tpu_custom_call.1} parent=1 // pred_check
      _
    $region11: #{tpu_custom_call.1} parent=1 // pred_check_branch
      %35 = sbr.rel (0) target = $region13
    $region12: #{tpu_custom_call.1} parent=1 // pred_region
      %36 = dma.done [#allocation3], 256
    $region13: #{tpu_custom_call.1} parent=1 // pred_fallthru
      _
    // Predicated region
    $region14: #{tpu_custom_call.1} parent=1 // pred_check
      _
    $region15: #{tpu_custom_call.1} parent=1 // pred_check_branch
      %38 = sbr.rel (0) target = $region17
    $region16: #{tpu_custom_call.1} parent=1 // pred_region
      %39 = dma.done [#allocation6], 256
    $region17: #{tpu_custom_call.1} parent=1 // pred_fallthru
      _
    %v40 = vld [vmem:[#allocation2] sm:$0xff]
    %v41 = vld [vmem:[#allocation2 + $0x8] sm:$0xff]
    %v42 = vld [vmem:[#allocation5] sm:$0xff]
    %v43 = vld [vmem:[#allocation5 + $0x8] sm:$0xff]
    %v44 = vsub.f32 %v42, %v40
    %v45 = vsub.f32 %v43, %v41
    %v46 = vrcp.pop %v42
    %v47 = vmul.f32 %v44, %v46
    %v48 = vrcp.pop %v43
    %v49 = vmul.f32 %v45, %v48
    %v50 = vand.u32 2147483647, %v47
    %v51 = vand.u32 2147483647, %v49
    %v52 = vadd.f32 %v50, %v51
    %53 = vst [vmem:[#allocation7] sm:$0xff] %v52
    // Predicated region
    $region18: #{tpu_custom_call.1} parent=1 // pred_check
      _
    $region19: #{tpu_custom_call.1} parent=1 // pred_check_branch
      %55 = sbr.rel (0) target = $region21
    $region20: #{tpu_custom_call.1} parent=1 // pred_region
      %s57 = ssub.s32 128, 128
      %58 = vsyncadd [#allocation4], %s57
      %s60 = sshll.u32 [#allocation7], 4
      %s61 = int_to_ptr.vmem [resolvable:$true] %s60
      %63 = dma.vmem_to_hbm [thread:$0]  %s61, 128, %s2, [#allocation4]
    $region21: #{tpu_custom_call.1} parent=1 // pred_fallthru
      _
    // Predicated region
    $region22: #{tpu_custom_call.1} parent=1 // pred_check
      _
    $region23: #{tpu_custom_call.1} parent=1 // pred_check_branch
      %65 = sbr.rel (0) target = $region25
    $region24: #{tpu_custom_call.1} parent=1 // pred_region
      %66 = dma.done [#allocation4], 128
    $region25: #{tpu_custom_call.1} parent=1 // pred_fallthru
      _
    %67 = vsyncpa [#allocation3], 1
    %68 = vsyncpa [#allocation6], 1
    %69 = vsyncpa [#allocation4], 1

</llo_original>
